<compile_context>
chip_gen: v5e
topology: v5e:2x2
jax: 0.10.0
libtpu: 0.0.40
codegen_flags: <defaults>
</compile_context>

<pallas_src>
import jax
import jax.numpy as jnp
from jax.experimental import pallas as pl
from jax.experimental.pallas import tpu as pltpu

IN_F = 4     # iris features
HIDDEN = 3   # hl in the PyTorch script
OUT_F = 3

LANES = 128       # lane width of a vreg
MAX_SB = 512      # max sublane-rows per grid step -> 512*128 = 65536 batch/step

# Packed-parameter layout (flat f32, padded to 32 entries for SMEM):
#   [ 0:12)  w1[f, h]  at  W1_OFF + f*HIDDEN + h      (stored as [in, out])
#   [12:15)  b1[h]     at  B1_OFF + h
#   [15:24)  w2[h, o]  at  W2_OFF + h*OUT_F + o       (stored as [in, out])
#   [24:27)  b2[o]     at  B2_OFF + o
W1_OFF = 0
B1_OFF = W1_OFF + IN_F * HIDDEN
W2_OFF = B1_OFF + HIDDEN
B2_OFF = W2_OFF + HIDDEN * OUT_F
N_PARAMS = B2_OFF + OUT_F          # 27
PARAMS_PADDED = 32


def fnn_kernel(p_ref, x_ref, o_ref):
    # p_ref: SMEM f32[32]             (packed w1, b1, w2, b2 scalars)
    # x_ref: VMEM f32[IN_F, SB, 128]  (batch spread over sublanes x lanes)
    # o_ref: VMEM f32[OUT_F, SB, 128]

    # Load each feature slab once: dense [SB, 128] tiles (full 8x128 vregs).
    xs = [x_ref[f] for f in range(IN_F)]

    # Hidden layer: 3 slabs, each an unrolled sum of 4 scalar*vector FMAs (VPU).
    h_slabs = []
    for h in range(HIDDEN):
        acc = p_ref[W1_OFF + h] * xs[0]                      # w1[0, h] * x[0]
        for f in range(1, IN_F):
            acc = acc + p_ref[W1_OFF + f * HIDDEN + h] * xs[f]
        h_slabs.append(jnp.maximum(acc + p_ref[B1_OFF + h], 0.0))   # +b1, ReLU

    # Output layer: 3 slabs, each 3 FMAs; store each row directly (no concat).
    for o in range(OUT_F):
        acc = p_ref[W2_OFF + o] * h_slabs[0]                 # w2[0, o] * h0
        for h in range(1, HIDDEN):
            acc = acc + p_ref[W2_OFF + h * OUT_F + o] * h_slabs[h]
        o_ref[o] = (acc + p_ref[B2_OFF + o]).astype(o_ref.dtype)


def pack_params(w1, b1, w2, b2):
    """Pack w1[4,3], b1[3], w2[3,3], b2[3] into one flat f32[32] array."""
    flat = jnp.concatenate([
        w1.reshape(-1), b1.reshape(-1), w2.reshape(-1), b2.reshape(-1)
    ]).astype(jnp.float32)
    return jnp.pad(flat, (0, PARAMS_PADDED - N_PARAMS))


def _round_up(n, m):
    return ((n + m - 1) // m) * m


def _choose_tiling(rows):
    """Pick the sublane tile (multiple of 8), keeping >=2 grid steps when
    possible so v7x's two TensorCores both get work, capped at MAX_SB."""
    half_rows = (rows + 1) // 2
    sb = min(MAX_SB, max(8, _round_up(half_rows, 8)))
    n_tiles = -(-rows // sb)
    return sb, n_tiles


def net_forward_feature_major(x_fm, params):
    """Feature-major fast path: x_fm f32[IN_F, B]  ->  f32[OUT_F, B].

    Use this directly (and consume the result feature-major, e.g. argmax over
    axis 0) to avoid all wrapper-side transposes of a memory-bound kernel."""
    B = x_fm.shape[1]
    rows = -(-B // LANES)                    # ceil(B / 128)
    sb, n_tiles = _choose_tiling(rows)
    rows_p = n_tiles * sb
    Bp = rows_p * LANES

    if Bp != B:
        x_fm = jnp.pad(x_fm, ((0, 0), (0, Bp - B)))
    x_3d = x_fm.reshape(IN_F, rows_p, LANES)     # free reshape, lane-dense

    out_3d = pl.pallas_call(
        fnn_kernel,
        out_shape=jax.ShapeDtypeStruct((OUT_F, rows_p, LANES), jnp.float32),
        grid=(n_tiles,),
        in_specs=[
            # All parameters ride in one tiny grid-invariant SMEM operand.
            pl.BlockSpec(memory_space=pltpu.MemorySpace.SMEM),
            # x tile: full feature dim, (sb, 128) dense batch slab.
            pl.BlockSpec((IN_F, sb, LANES), lambda i: (0, i, 0)),
        ],
        out_specs=pl.BlockSpec((OUT_F, sb, LANES), lambda i: (0, i, 0)),
        compiler_params=pltpu.CompilerParams(
            dimension_semantics=("parallel",),   # shard batch tiles across TCs (v7x)
            vmem_limit_bytes=16 * 1024 * 1024,   # ample: <=~3.7 MiB actually used
        ),
    )(params, x_3d)

    return out_3d.reshape(OUT_F, Bp)[:, :B]


def net_forward(x, params):
    """PyTorch-layout wrapper: x f32[B, 4] -> f32[B, 3].

    The two transposes here are pure layout plumbing; prefer the
    feature-major entry point above when the caller can keep that layout."""
    B = x.shape[0]
    out_fm = net_forward_feature_major(jnp.transpose(x), params)   # [OUT_F, B]
    return jnp.transpose(out_fm)                                   # [B, OUT_F]


def init_params(key):
    # Deterministic init mimicking PyTorch nn.Linear default:
    # U(-1/sqrt(fan_in), 1/sqrt(fan_in)) for both weight and bias.
    k1, k2, k3, k4 = jax.random.split(key, 4)
    bound1 = 1.0 / (IN_F ** 0.5)
    bound2 = 1.0 / (HIDDEN ** 0.5)
    # Stored as [in, out] (transposed relative to PyTorch's [out, in]).
    w1 = jax.random.uniform(k1, (IN_F, HIDDEN), jnp.float32, -bound1, bound1)
    b1 = jax.random.uniform(k2, (HIDDEN,), jnp.float32, -bound1, bound1)
    w2 = jax.random.uniform(k3, (HIDDEN, OUT_F), jnp.float32, -bound2, bound2)
    b2 = jax.random.uniform(k4, (OUT_F,), jnp.float32, -bound2, bound2)
    return w1, b1, w2, b2


def _reference(x, w1, b1, w2, b2):
    return jnp.maximum(x @ w1 + b1, 0.0) @ w2 + b2


if __name__ == "__main__":
    key = jax.random.PRNGKey(0)
    kx1, kx2, kx3, kx4, kp = jax.random.split(key, 5)

    w1, b1, w2, b2 = init_params(kp)
    params = pack_params(w1, b1, w2, b2)

    # Small batch (single 8x128 tile, heavy padding path).
    x_small = jax.random.normal(kx1, (8, IN_F), jnp.float32)
    out_small = jax.block_until_ready(net_forward(x_small, params))
    ref_small = _reference(x_small, w1, b1, w2, b2)
    assert out_small.shape == (8, OUT_F)
    assert jnp.allclose(out_small, ref_small, atol=1e-5, rtol=1e-5)

    # Ragged batch that does not fill a lane row.
    x_mid = jax.random.normal(kx2, (300, IN_F), jnp.float32)
    out_mid = jax.block_until_ready(net_forward(x_mid, params))
    ref_mid = _reference(x_mid, w1, b1, w2, b2)
    assert out_mid.shape == (300, OUT_F)
    assert jnp.allclose(out_mid, ref_mid, atol=1e-5, rtol=1e-5)

    # Multi-tile grid (2 steps -> exercises the parallel grid path).
    x_big = jax.random.normal(kx3, (3000, IN_F), jnp.float32)
    out_big = jax.block_until_ready(net_forward(x_big, params))
    ref_big = _reference(x_big, w1, b1, w2, b2)
    assert out_big.shape == (3000, OUT_F)
    assert jnp.allclose(out_big, ref_big, atol=1e-5, rtol=1e-5)

    # Large batch hitting the MAX_SB tile cap (4 grid steps) and the
    # feature-major fast path (no wrapper transposes).
    x_huge = jax.random.normal(kx4, (200000, IN_F), jnp.float32)
    out_huge_fm = jax.block_until_ready(
        net_forward_feature_major(jnp.transpose(x_huge), params))
    ref_huge = _reference(x_huge, w1, b1, w2, b2)
    assert out_huge_fm.shape == (OUT_F, 200000)
    assert jnp.allclose(jnp.transpose(out_huge_fm), ref_huge, atol=1e-5, rtol=1e-5)

    print("KERNEL_OK")
</pallas_src>

<mosaic_0001>
module attributes {stable_mosaic.version = 11 : i64} {
  func.func @fnn_kernel(%arg0: i32, %arg1: memref<32xf32, #tpu.memory_space<smem>>, %arg2: memref<4x8x128xf32, #tpu.memory_space<vmem>>, %arg3: memref<3x8x128xf32, #tpu.memory_space<vmem>>) attributes {dimension_semantics = [#tpu.dimension_semantics<parallel>], iteration_bounds = array<i64: 1>, scalar_prefetch = 0 : i64, scratch_operands = 0 : i64, tpu.core_type = #tpu.core_type<tc>, window_params = [{transform_indices = @transform_0, window_bounds = array<i64: 32>}, {transform_indices = @transform_1, window_bounds = array<i64: 4, 8, 128>}, {transform_indices = @transform_2, window_bounds = array<i64: 3, 8, 128>}]} {
    %c0 = arith.constant 0 : index
    %c0_0 = arith.constant 0 : index
    %c0_1 = arith.constant 0 : index
    %0 = vector.load %arg2[%c0, %c0_0, %c0_1] : memref<4x8x128xf32, #tpu.memory_space<vmem>>, vector<1x8x128xf32>
    %1 = vector.shape_cast %0 : vector<1x8x128xf32> to vector<8x128xf32>
    %c1 = arith.constant 1 : index
    %c0_2 = arith.constant 0 : index
    %c0_3 = arith.constant 0 : index
    %2 = vector.load %arg2[%c1, %c0_2, %c0_3] : memref<4x8x128xf32, #tpu.memory_space<vmem>>, vector<1x8x128xf32>
    %3 = vector.shape_cast %2 : vector<1x8x128xf32> to vector<8x128xf32>
    %c2 = arith.constant 2 : index
    %c0_4 = arith.constant 0 : index
    %c0_5 = arith.constant 0 : index
    %4 = vector.load %arg2[%c2, %c0_4, %c0_5] : memref<4x8x128xf32, #tpu.memory_space<vmem>>, vector<1x8x128xf32>
    %5 = vector.shape_cast %4 : vector<1x8x128xf32> to vector<8x128xf32>
    %c3 = arith.constant 3 : index
    %c0_6 = arith.constant 0 : index
    %c0_7 = arith.constant 0 : index
    %6 = vector.load %arg2[%c3, %c0_6, %c0_7] : memref<4x8x128xf32, #tpu.memory_space<vmem>>, vector<1x8x128xf32>
    %7 = vector.shape_cast %6 : vector<1x8x128xf32> to vector<8x128xf32>
    %c0_8 = arith.constant 0 : index
    %8 = memref.load %arg1[%c0_8] : memref<32xf32, #tpu.memory_space<smem>>
    %9 = vector.broadcast %8 : f32 to vector<8x128xf32>
    %10 = arith.mulf %9, %1 : vector<8x128xf32>
    %c3_9 = arith.constant 3 : index
    %11 = memref.load %arg1[%c3_9] : memref<32xf32, #tpu.memory_space<smem>>
    %12 = vector.broadcast %11 : f32 to vector<8x128xf32>
    %13 = arith.mulf %12, %3 : vector<8x128xf32>
    %14 = arith.addf %10, %13 : vector<8x128xf32>
    %c6 = arith.constant 6 : index
    %15 = memref.load %arg1[%c6] : memref<32xf32, #tpu.memory_space<smem>>
    %16 = vector.broadcast %15 : f32 to vector<8x128xf32>
    %17 = arith.mulf %16, %5 : vector<8x128xf32>
    %18 = arith.addf %14, %17 : vector<8x128xf32>
    %c9 = arith.constant 9 : index
    %19 = memref.load %arg1[%c9] : memref<32xf32, #tpu.memory_space<smem>>
    %20 = vector.broadcast %19 : f32 to vector<8x128xf32>
    %21 = arith.mulf %20, %7 : vector<8x128xf32>
    %22 = arith.addf %18, %21 : vector<8x128xf32>
    %c12 = arith.constant 12 : index
    %23 = memref.load %arg1[%c12] : memref<32xf32, #tpu.memory_space<smem>>
    %24 = vector.broadcast %23 : f32 to vector<8x128xf32>
    %25 = arith.addf %22, %24 : vector<8x128xf32>
    %cst = arith.constant 0.000000e+00 : f32
    %26 = vector.broadcast %cst : f32 to vector<8x128xf32>
    %27 = arith.maximumf %25, %26 : vector<8x128xf32>
    %c1_10 = arith.constant 1 : index
    %28 = memref.load %arg1[%c1_10] : memref<32xf32, #tpu.memory_space<smem>>
    %29 = vector.broadcast %28 : f32 to vector<8x128xf32>
    %30 = arith.mulf %29, %1 : vector<8x128xf32>
    %c4 = arith.constant 4 : index
    %31 = memref.load %arg1[%c4] : memref<32xf32, #tpu.memory_space<smem>>
    %32 = vector.broadcast %31 : f32 to vector<8x128xf32>
    %33 = arith.mulf %32, %3 : vector<8x128xf32>
    %34 = arith.addf %30, %33 : vector<8x128xf32>
    %c7 = arith.constant 7 : index
    %35 = memref.load %arg1[%c7] : memref<32xf32, #tpu.memory_space<smem>>
    %36 = vector.broadcast %35 : f32 to vector<8x128xf32>
    %37 = arith.mulf %36, %5 : vector<8x128xf32>
    %38 = arith.addf %34, %37 : vector<8x128xf32>
    %c10 = arith.constant 10 : index
    %39 = memref.load %arg1[%c10] : memref<32xf32, #tpu.memory_space<smem>>
    %40 = vector.broadcast %39 : f32 to vector<8x128xf32>
    %41 = arith.mulf %40, %7 : vector<8x128xf32>
    %42 = arith.addf %38, %41 : vector<8x128xf32>
    %c13 = arith.constant 13 : index
    %43 = memref.load %arg1[%c13] : memref<32xf32, #tpu.memory_space<smem>>
    %44 = vector.broadcast %43 : f32 to vector<8x128xf32>
    %45 = arith.addf %42, %44 : vector<8x128xf32>
    %cst_11 = arith.constant 0.000000e+00 : f32
    %46 = vector.broadcast %cst_11 : f32 to vector<8x128xf32>
    %47 = arith.maximumf %45, %46 : vector<8x128xf32>
    %c2_12 = arith.constant 2 : index
    %48 = memref.load %arg1[%c2_12] : memref<32xf32, #tpu.memory_space<smem>>
    %49 = vector.broadcast %48 : f32 to vector<8x128xf32>
    %50 = arith.mulf %49, %1 : vector<8x128xf32>
    %c5 = arith.constant 5 : index
    %51 = memref.load %arg1[%c5] : memref<32xf32, #tpu.memory_space<smem>>
    %52 = vector.broadcast %51 : f32 to vector<8x128xf32>
    %53 = arith.mulf %52, %3 : vector<8x128xf32>
    %54 = arith.addf %50, %53 : vector<8x128xf32>
    %c8 = arith.constant 8 : index
    %55 = memref.load %arg1[%c8] : memref<32xf32, #tpu.memory_space<smem>>
    %56 = vector.broadcast %55 : f32 to vector<8x128xf32>
    %57 = arith.mulf %56, %5 : vector<8x128xf32>
    %58 = arith.addf %54, %57 : vector<8x128xf32>
    %c11 = arith.constant 11 : index
    %59 = memref.load %arg1[%c11] : memref<32xf32, #tpu.memory_space<smem>>
    %60 = vector.broadcast %59 : f32 to vector<8x128xf32>
    %61 = arith.mulf %60, %7 : vector<8x128xf32>
    %62 = arith.addf %58, %61 : vector<8x128xf32>
    %c14 = arith.constant 14 : index
    %63 = memref.load %arg1[%c14] : memref<32xf32, #tpu.memory_space<smem>>
    %64 = vector.broadcast %63 : f32 to vector<8x128xf32>
    %65 = arith.addf %62, %64 : vector<8x128xf32>
    %cst_13 = arith.constant 0.000000e+00 : f32
    %66 = vector.broadcast %cst_13 : f32 to vector<8x128xf32>
    %67 = arith.maximumf %65, %66 : vector<8x128xf32>
    %c15 = arith.constant 15 : index
    %68 = memref.load %arg1[%c15] : memref<32xf32, #tpu.memory_space<smem>>
    %69 = vector.broadcast %68 : f32 to vector<8x128xf32>
    %70 = arith.mulf %69, %27 : vector<8x128xf32>
    %c18 = arith.constant 18 : index
    %71 = memref.load %arg1[%c18] : memref<32xf32, #tpu.memory_space<smem>>
    %72 = vector.broadcast %71 : f32 to vector<8x128xf32>
    %73 = arith.mulf %72, %47 : vector<8x128xf32>
    %74 = arith.addf %70, %73 : vector<8x128xf32>
    %c21 = arith.constant 21 : index
    %75 = memref.load %arg1[%c21] : memref<32xf32, #tpu.memory_space<smem>>
    %76 = vector.broadcast %75 : f32 to vector<8x128xf32>
    %77 = arith.mulf %76, %67 : vector<8x128xf32>
    %78 = arith.addf %74, %77 : vector<8x128xf32>
    %c24 = arith.constant 24 : index
    %79 = memref.load %arg1[%c24] : memref<32xf32, #tpu.memory_space<smem>>
    %80 = vector.broadcast %79 : f32 to vector<8x128xf32>
    %81 = arith.addf %78, %80 : vector<8x128xf32>
    %c0_14 = arith.constant 0 : index
    %c0_15 = arith.constant 0 : index
    %c0_16 = arith.constant 0 : index
    %82 = vector.load %arg3[%c0_14, %c0_15, %c0_16] : memref<3x8x128xf32, #tpu.memory_space<vmem>>, vector<1x8x128xf32>
    %83 = vector.shape_cast %82 : vector<1x8x128xf32> to vector<8x128xf32>
    %84 = vector.shape_cast %81 : vector<8x128xf32> to vector<1x8x128xf32>
    tpu.vector_store %arg3[%c0_14, %c0_15, %c0_16], %84 {strides = array<i32>} : memref<3x8x128xf32, #tpu.memory_space<vmem>>, vector<1x8x128xf32>,
    %c16 = arith.constant 16 : index
    %85 = memref.load %arg1[%c16] : memref<32xf32, #tpu.memory_space<smem>>
    %86 = vector.broadcast %85 : f32 to vector<8x128xf32>
    %87 = arith.mulf %86, %27 : vector<8x128xf32>
    %c19 = arith.constant 19 : index
    %88 = memref.load %arg1[%c19] : memref<32xf32, #tpu.memory_space<smem>>
    %89 = vector.broadcast %88 : f32 to vector<8x128xf32>
    %90 = arith.mulf %89, %47 : vector<8x128xf32>
    %91 = arith.addf %87, %90 : vector<8x128xf32>
    %c22 = arith.constant 22 : index
    %92 = memref.load %arg1[%c22] : memref<32xf32, #tpu.memory_space<smem>>
    %93 = vector.broadcast %92 : f32 to vector<8x128xf32>
    %94 = arith.mulf %93, %67 : vector<8x128xf32>
    %95 = arith.addf %91, %94 : vector<8x128xf32>
    %c25 = arith.constant 25 : index
    %96 = memref.load %arg1[%c25] : memref<32xf32, #tpu.memory_space<smem>>
    %97 = vector.broadcast %96 : f32 to vector<8x128xf32>
    %98 = arith.addf %95, %97 : vector<8x128xf32>
    %c1_17 = arith.constant 1 : index
    %c0_18 = arith.constant 0 : index
    %c0_19 = arith.constant 0 : index
    %99 = vector.load %arg3[%c1_17, %c0_18, %c0_19] : memref<3x8x128xf32, #tpu.memory_space<vmem>>, vector<1x8x128xf32>
    %100 = vector.shape_cast %99 : vector<1x8x128xf32> to vector<8x128xf32>
    %101 = vector.shape_cast %98 : vector<8x128xf32> to vector<1x8x128xf32>
    tpu.vector_store %arg3[%c1_17, %c0_18, %c0_19], %101 {strides = array<i32>} : memref<3x8x128xf32, #tpu.memory_space<vmem>>, vector<1x8x128xf32>,
    %c17 = arith.constant 17 : index
    %102 = memref.load %arg1[%c17] : memref<32xf32, #tpu.memory_space<smem>>
    %103 = vector.broadcast %102 : f32 to vector<8x128xf32>
    %104 = arith.mulf %103, %27 : vector<8x128xf32>
    %c20 = arith.constant 20 : index
    %105 = memref.load %arg1[%c20] : memref<32xf32, #tpu.memory_space<smem>>
    %106 = vector.broadcast %105 : f32 to vector<8x128xf32>
    %107 = arith.mulf %106, %47 : vector<8x128xf32>
    %108 = arith.addf %104, %107 : vector<8x128xf32>
    %c23 = arith.constant 23 : index
    %109 = memref.load %arg1[%c23] : memref<32xf32, #tpu.memory_space<smem>>
    %110 = vector.broadcast %109 : f32 to vector<8x128xf32>
    %111 = arith.mulf %110, %67 : vector<8x128xf32>
    %112 = arith.addf %108, %111 : vector<8x128xf32>
    %c26 = arith.constant 26 : index
    %113 = memref.load %arg1[%c26] : memref<32xf32, #tpu.memory_space<smem>>
    %114 = vector.broadcast %113 : f32 to vector<8x128xf32>
    %115 = arith.addf %112, %114 : vector<8x128xf32>
    %c2_20 = arith.constant 2 : index
    %c0_21 = arith.constant 0 : index
    %c0_22 = arith.constant 0 : index
    %116 = vector.load %arg3[%c2_20, %c0_21, %c0_22] : memref<3x8x128xf32, #tpu.memory_space<vmem>>, vector<1x8x128xf32>
    %117 = vector.shape_cast %116 : vector<1x8x128xf32> to vector<8x128xf32>
    %118 = vector.shape_cast %115 : vector<8x128xf32> to vector<1x8x128xf32>
    tpu.vector_store %arg3[%c2_20, %c0_21, %c0_22], %118 {strides = array<i32>} : memref<3x8x128xf32, #tpu.memory_space<vmem>>, vector<1x8x128xf32>,
    return
  }
  func.func @transform_0(%arg0: i32) -> i32 {
    %c0_i32 = arith.constant 0 : i32
    %c0_i32_0 = arith.constant 0 : i32
    return %c0_i32 : i32
  }
  func.func @transform_1(%arg0: i32) -> (i32, i32, i32) {
    %c0_i32 = arith.constant 0 : i32
    %c0_i32_0 = arith.constant 0 : i32
    %c0_i32_1 = arith.constant 0 : i32
    return %c0_i32, %arg0, %c0_i32_0 : i32, i32, i32
  }
  func.func @transform_2(%arg0: i32) -> (i32, i32, i32) {
    %c0_i32 = arith.constant 0 : i32
    %c0_i32_0 = arith.constant 0 : i32
    %c0_i32_1 = arith.constant 0 : i32
    return %c0_i32, %arg0, %c0_i32_0 : i32, i32, i32
  }
}

</mosaic_0001>

<llo_original>
// kernel: tpu_custom_call.1
$region0: #{tpu_custom_call.1}
  #allocation0 [shape = 'u32[]', space=smem, size = 0x4, offset = 0x4, fixed_abs, tag = 'smem constant byte address 0x4 - core index']
  #allocation1 [shape = 'u32[72,128]{1,0:T(1,128)}', space=vmem, size = 0x9000, scoped, tag = 'internal scratch']
  %s0 = inlined_call_operand.hbm [shape: f32[32], index: 0, kind: input, shape index: {}]
  %s1 = inlined_call_operand.hbm [shape: f32[4,8,128], index: 1, kind: input, shape index: {}]
  %s2 = inlined_call_operand.hbm [shape: f32[3,8,128], index: 2, kind: output, shape index: {}]
  %s3 = sld [smem:[#allocation0]]
  $region26: #{tpu_custom_call.1} parent=0
    _
  %s5 = ssub.s32 1, %s3
  %s6 = scalar_select 0, %s5, %s3
  $region1: #{tpu_custom_call.1} parent=0
    #allocation2 [shape = 'u8[512]{0}', space=smem, size = 0x200, scoped, tag = 'input window, operand 0, single buffered']
    #allocation3 [shape = 's32[1]{0}', space=sflag, size = 0x4, scoped, tag = 'scoped memory for tpu_custom_call.1']
    #allocation4 [shape = 's32[1]{0}', space=sflag, size = 0x4, scoped, tag = 'scoped memory for tpu_custom_call.1']
    #allocation5 [shape = 's32[1]{0}', space=sflag, size = 0x4, scoped, tag = 'scoped memory for tpu_custom_call.1']
    #allocation6 [shape = 'u8[16384]{0}', space=vmem, size = 0x4000, scoped, tag = 'input window, operand 1, single buffered']
    #allocation7 [shape = 'u8[12288]{0}', space=vmem, size = 0x3000, scoped, tag = 'output window, operand 0, single buffered']
    %7 = vsyncpa [#allocation5], 0
    %8 = vsyncpa [#allocation3], 0
    %9 = vsyncpa [#allocation4], 0
    // Predicated region
    $region2: #{tpu_custom_call.1} parent=1 // pred_check
      _
    $region3: #{tpu_custom_call.1} parent=1 // pred_check_branch
      %11 = sbr.rel (0) target = $region5
    $region4: #{tpu_custom_call.1} parent=1 // pred_region
      %13 = vsyncadd [#allocation5], 0
      %s15 = sshll.u32 %s0, 4
      %s16 = int_to_ptr.hbm [resolvable:$true] %s15
      %18 = dma.hbm_to_smem %s16, 16, [#allocation2], [#allocation5]
    $region5: #{tpu_custom_call.1} parent=1 // pred_fallthru
      _
    // Predicated region
    $region6: #{tpu_custom_call.1} parent=1 // pred_check
      _
    $region7: #{tpu_custom_call.1} parent=1 // pred_check_branch
      %20 = sbr.rel (0) target = $region9
    $region8: #{tpu_custom_call.1} parent=1 // pred_region
      %22 = vsyncadd [#allocation3], 0
      %s23 = sshll.u32 %s1, 4
      %s24 = int_to_ptr.hbm [resolvable:$true] %s23
      %s25 = sshll.u32 [#allocation6], 4
      %s26 = int_to_ptr.vmem [resolvable:$true] %s25
      %31 = dma.hbm_to_vmem [thread:$0]  %s24, 512, %s26, [#allocation3], 128, 128, 8
    $region9: #{tpu_custom_call.1} parent=1 // pred_fallthru
      _
    // Predicated region
    $region10: #{tpu_custom_call.1} parent=1 // pred_check
      _
    $region11: #{tpu_custom_call.1} parent=1 // pred_check_branch
      %33 = sbr.rel (0) target = $region13
    $region12: #{tpu_custom_call.1} parent=1 // pred_region
      %35 = dma.done [#allocation5], 16
    $region13: #{tpu_custom_call.1} parent=1 // pred_fallthru
      _
    // Predicated region
    $region14: #{tpu_custom_call.1} parent=1 // pred_check
      _
    $region15: #{tpu_custom_call.1} parent=1 // pred_check_branch
      %37 = sbr.rel (0) target = $region17
    $region16: #{tpu_custom_call.1} parent=1 // pred_region
      %39 = dma.done [#allocation3], 512
    $region17: #{tpu_custom_call.1} parent=1 // pred_fallthru
      _
    %40 = sfence
    %v41 = vld [vmem:[#allocation6] sm:$0xff]
    %s42 = scalar_lea.vmem [#allocation6], 8
    %v43 = vld [vmem:[%s42] sm:$0xff]
    %s44 = scalar_lea.vmem [#allocation6], 16
    %v45 = vld [vmem:[%s44] sm:$0xff]
    %s46 = scalar_lea.vmem [#allocation6], 24
    %v47 = vld [vmem:[%s46] sm:$0xff]
    %s48 = sld [smem:[#allocation2]]
    %v49 = vstv %s48
    %v50 = vmul.f32 %v49, %v41
    %s51 = sld [smem:[#allocation2 + $0x3]]
    %v52 = vstv %s51
    %v53 = vmul.f32 %v52, %v43
    %v54 = vadd.f32 %v50, %v53
    %s55 = sld [smem:[#allocation2 + $0x6]]
    %v56 = vstv %s55
    %v57 = vmul.f32 %v56, %v45
    %v58 = vadd.f32 %v54, %v57
    %s59 = sld [smem:[#allocation2 + $0x9]]
    %v60 = vstv %s59
    %v61 = vmul.f32 %v60, %v47
    %v62 = vadd.f32 %v58, %v61
    %s63 = sld [smem:[#allocation2 + $0xc]]
    %v64 = vstv %s63
    %v65 = vadd.f32 %v62, %v64
    %v66 = vmax.f32 %v65, 0.0
    %s67 = sld [smem:[#allocation2 + $0x1]]
    %v68 = vstv %s67
    %v69 = vmul.f32 %v68, %v41
    %s70 = sld [smem:[#allocation2 + $0x4]]
    %v71 = vstv %s70
    %v72 = vmul.f32 %v71, %v43
    %v73 = vadd.f32 %v69, %v72
    %s74 = sld [smem:[#allocation2 + $0x7]]
    %v75 = vstv %s74
    %v76 = vmul.f32 %v75, %v45
    %v77 = vadd.f32 %v73, %v76
    %s78 = sld [smem:[#allocation2 + $0xa]]
    %v79 = vstv %s78
    %v80 = vmul.f32 %v79, %v47
    %v81 = vadd.f32 %v77, %v80
    %s82 = sld [smem:[#allocation2 + $0xd]]
    %v83 = vstv %s82
    %v84 = vadd.f32 %v81, %v83
    %v85 = vmax.f32 %v84, 0.0
    %s86 = sld [smem:[#allocation2 + $0x2]]
    %v87 = vstv %s86
    %v88 = vmul.f32 %v87, %v41
    %s89 = sld [smem:[#allocation2 + $0x5]]
    %v90 = vstv %s89
    %v91 = vmul.f32 %v90, %v43
    %v92 = vadd.f32 %v88, %v91
    %s93 = sld [smem:[#allocation2 + $0x8]]
    %v94 = vstv %s93
    %v95 = vmul.f32 %v94, %v45
    %v96 = vadd.f32 %v92, %v95
    %s97 = sld [smem:[#allocation2 + $0xb]]
    %v98 = vstv %s97
    %v99 = vmul.f32 %v98, %v47
    %v100 = vadd.f32 %v96, %v99
    %s101 = sld [smem:[#allocation2 + $0xe]]
    %v102 = vstv %s101
    %v103 = vadd.f32 %v100, %v102
    %v104 = vmax.f32 %v103, 0.0
    %s105 = sld [smem:[#allocation2 + $0xf]]
    %v106 = vstv %s105
    %v107 = vmul.f32 %v106, %v66
    %s108 = sld [smem:[#allocation2 + $0x12]]
    %v109 = vstv %s108
    %v110 = vmul.f32 %v109, %v85
    %v111 = vadd.f32 %v107, %v110
    %s112 = sld [smem:[#allocation2 + $0x15]]
    %v113 = vstv %s112
    %v114 = vmul.f32 %v113, %v104
    %v115 = vadd.f32 %v111, %v114
    %s116 = sld [smem:[#allocation2 + $0x18]]
    %v117 = vstv %s116
    %v118 = vadd.f32 %v115, %v117
    %119 = vst [vmem:[#allocation7] sm:$0xff] %v118
    %s120 = sld [smem:[#allocation2 + $0x10]]
    %v121 = vstv %s120
    %v122 = vmul.f32 %v121, %v66
    %s123 = sld [smem:[#allocation2 + $0x13]]
    %v124 = vstv %s123
    %v125 = vmul.f32 %v124, %v85
    %v126 = vadd.f32 %v122, %v125
    %s127 = sld [smem:[#allocation2 + $0x16]]
    %v128 = vstv %s127
    %v129 = vmul.f32 %v128, %v104
    %v130 = vadd.f32 %v126, %v129
    %s131 = sld [smem:[#allocation2 + $0x19]]
    %v132 = vstv %s131
    %v133 = vadd.f32 %v130, %v132
    %s134 = scalar_lea.vmem [#allocation7], 8
    %135 = vst [vmem:[%s134] sm:$0xff] %v133
    %s136 = sld [smem:[#allocation2 + $0x11]]
    %v137 = vstv %s136
    %v138 = vmul.f32 %v137, %v66
    %s139 = sld [smem:[#allocation2 + $0x14]]
    %v140 = vstv %s139
    %v141 = vmul.f32 %v140, %v85
    %v142 = vadd.f32 %v138, %v141
    %s143 = sld [smem:[#allocation2 + $0x17]]
    %v144 = vstv %s143
    %v145 = vmul.f32 %v144, %v104
    %v146 = vadd.f32 %v142, %v145
    %s147 = sld [smem:[#allocation2 + $0x1a]]
    %v148 = vstv %s147
    %v149 = vadd.f32 %v146, %v148
    %s150 = scalar_lea.vmem [#allocation7], 16
    %151 = vst [vmem:[%s150] sm:$0xff] %v149
    // Predicated region
    $region18: #{tpu_custom_call.1} parent=1 // pred_check
      _
    $region19: #{tpu_custom_call.1} parent=1 // pred_check_branch
      %153 = sbr.rel (0) target = $region21
    $region20: #{tpu_custom_call.1} parent=1 // pred_region
      %155 = vsyncadd [#allocation4], 0
      %s156 = sshll.u32 [#allocation7], 4
      %s157 = int_to_ptr.vmem [resolvable:$true] %s156
      %s158 = sshll.u32 %s2, 4
      %s159 = int_to_ptr.hbm [resolvable:$true] %s158
      %164 = dma.vmem_to_hbm [thread:$0]  %s157, 384, %s159, [#allocation4], 128, 128, 8
    $region21: #{tpu_custom_call.1} parent=1 // pred_fallthru
      _
    // Predicated region
    $region22: #{tpu_custom_call.1} parent=1 // pred_check
      _
    $region23: #{tpu_custom_call.1} parent=1 // pred_check_branch
      %166 = sbr.rel (0) target = $region25
    $region24: #{tpu_custom_call.1} parent=1 // pred_region
      %168 = dma.done [#allocation4], 384
    $region25: #{tpu_custom_call.1} parent=1 // pred_fallthru
      _
    %169 = vsyncpa [#allocation3], 1
    %170 = vsyncpa [#allocation4], 1
    %171 = vsyncpa [#allocation5], 1

</llo_original>
